<compile_context>
chip_gen: v6e
topology: v6e:2x2x1
jax: 0.10.0
libtpu: 0.0.40
codegen_flags: <defaults>
</compile_context>

<pallas_src>
import functools

import jax
import jax.numpy as jnp
from jax.experimental import pallas as pl
from jax.experimental.pallas import tpu as pltpu


def _dice_kernel(t_ref, s_ref, p_ref, oh_ref, inter_ref, ssum_ref, cnt_ref,
                 *, tn, hw, masked):
    i = pl.program_id(1)                               # HW-tile index (reduction axis)

    x = s_ref[...]                                     # (C, TN) f32 logits
    m = jnp.max(x, axis=0, keepdims=True)              # channel max
    e = jnp.exp(x - m)
    denom = jnp.sum(e, axis=0, keepdims=True)
    p = e * pl.reciprocal(denom, approx=False)         # softmax over classes (EUP divide)

    tgt = t_ref[...]                                   # (1, TN) int32 class ids
    cls = jax.lax.broadcasted_iota(jnp.int32, p.shape, 0)
    oh = (cls == tgt).astype(p.dtype)                  # (C, TN) one-hot

    p_ref[...] = p
    oh_ref[...] = oh

    if masked:                                         # static: only when HW was padded
        col = i * tn + jax.lax.broadcasted_iota(jnp.int32, (1, tn), 1)
        valid = (col < hw).astype(p.dtype)
        p = p * valid
        oh = oh * valid

    @pl.when(i == 0)
    def _():
        inter_ref[...] = jnp.zeros_like(inter_ref)
        ssum_ref[...] = jnp.zeros_like(ssum_ref)
        cnt_ref[...] = jnp.zeros_like(cnt_ref)

    inter_ref[...] += jnp.sum(p * oh, axis=1, keepdims=True)   # (C, 1)
    ssum_ref[...] += jnp.sum(p, axis=1, keepdims=True)         # (C, 1)
    cnt_ref[...] += jnp.sum(oh, axis=1, keepdims=True)         # (C, 1)


def _pick_tile(hw, c):
    """Lane tile: multiple of 128, sized so the f32 logits block is ~<=256 KB."""
    lane = 128
    max_tn = max(lane, min(8192, ((256 * 1024) // (4 * c)) // lane * lane))
    if hw <= max_tn:
        return -(-hw // lane) * lane                   # single tile, rounded up to 128
    for tn in range(max_tn, lane - 1, -lane):          # prefer a divisor (avoids padding)
        if hw % tn == 0:
            return tn
    return max_tn                                      # fall back; wrapper pads the tail


@functools.partial(jax.jit, static_argnames=("smooth",))
def batch_weight_dice_loss(scores, target, smooth=1e-07):
    """Pallas TPU version of BatchWeightDICELoss.forward.

    scores: [B, C, H, W] float logits
    target: [B, H, W]    integer class labels in [0, C)
    returns (loss, softmax_scores [B,C,H,W], target_one_hot [B,C,H,W])
    """
    B, C, H, W = scores.shape
    HW = H * W
    TN = _pick_tile(HW, C)
    n_tiles = -(-HW // TN)
    HW_pad = n_tiles * TN
    pad = HW_pad - HW

    s2 = scores.reshape(B, C, HW).astype(jnp.float32)  # contiguous views, no transpose
    t2 = target.reshape(B, 1, HW).astype(jnp.int32)
    if pad:
        s2 = jnp.pad(s2, ((0, 0), (0, 0), (0, pad)))
        t2 = jnp.pad(t2, ((0, 0), (0, 0), (0, pad)))

    kernel = functools.partial(_dice_kernel, tn=TN, hw=HW, masked=pad > 0)

    p_pad, oh_pad, inter, ssum, cnt = pl.pallas_call(
        kernel,
        out_shape=(
            jax.ShapeDtypeStruct((B, C, HW_pad), jnp.float32),   # softmax scores
            jax.ShapeDtypeStruct((B, C, HW_pad), jnp.float32),   # one-hot target
            jax.ShapeDtypeStruct((B, C, 1), jnp.float32),        # per-(b, class) intersection
            jax.ShapeDtypeStruct((B, C, 1), jnp.float32),        # per-(b, class) score sum
            jax.ShapeDtypeStruct((B, C, 1), jnp.float32),        # per-(b, class) target count
        ),
        grid=(B, n_tiles),
        in_specs=[
            pl.BlockSpec((None, 1, TN), lambda b, i: (b, 0, i)),
            pl.BlockSpec((None, C, TN), lambda b, i: (b, 0, i)),
        ],
        out_specs=(
            pl.BlockSpec((None, C, TN), lambda b, i: (b, 0, i)),
            pl.BlockSpec((None, C, TN), lambda b, i: (b, 0, i)),
            pl.BlockSpec((None, C, 1), lambda b, i: (b, 0, 0)),
            pl.BlockSpec((None, C, 1), lambda b, i: (b, 0, 0)),
            pl.BlockSpec((None, C, 1), lambda b, i: (b, 0, 0)),
        ),
        compiler_params=pltpu.CompilerParams(
            dimension_semantics=("parallel", "arbitrary")),
    )(t2, s2)

    inter = jnp.sum(inter[:, :, 0], axis=0)     # (C,)
    ssum = jnp.sum(ssum[:, :, 0], axis=0)
    cnt = jnp.sum(cnt[:, :, 0], axis=0)

    # weights: per-class pixel counts; zero counts replaced by the max count,
    # then weights = B*H*W / counts   (matches torch semantics exactly)
    w = jnp.where(cnt == 0.0, jnp.max(cnt), cnt)
    w = (B * H * W) / w

    per_class_loss = (1.0 - (2.0 * inter + smooth) / (ssum + cnt + smooth)) * w
    loss = jnp.sum(per_class_loss) / jnp.sum(w)

    p = p_pad[:, :, :HW].reshape(B, C, H, W)
    oh = oh_pad[:, :, :HW].reshape(B, C, H, W)
    return loss, p, oh


def _reference(scores, target, smooth=1e-07):
    """Pure-JAX reference mirroring the PyTorch module (for sanity check)."""
    B, C, H, W = scores.shape
    p = jax.nn.softmax(scores.astype(jnp.float32), axis=1)
    oh = jax.nn.one_hot(target, C, axis=1, dtype=jnp.float32)
    cnt = jnp.sum(oh, axis=(0, 2, 3))
    w = jnp.where(cnt == 0.0, jnp.max(cnt), cnt)
    w = (B * H * W) / w
    inter = jnp.sum(p * oh, axis=(0, 2, 3))
    ssum = jnp.sum(p, axis=(0, 2, 3))
    per_cls = (1.0 - (2.0 * inter + smooth) / (ssum + cnt + smooth)) * w
    return jnp.sum(per_cls) / jnp.sum(w), p, oh


if __name__ == "__main__":
    key = jax.random.PRNGKey(0)

    # case 1: H*W multiple of 128 (no padding / no masking path)
    # case 2: ragged H*W (wrapper pads to 128, kernel masks the tail lanes)
    for (B, C, H, W) in [(2, 4, 16, 16), (2, 4, 10, 10)]:
        k1, k2 = jax.random.split(jax.random.fold_in(key, H))
        scores = jax.random.normal(k1, (B, C, H, W), dtype=jnp.float32)
        target = jax.random.randint(k2, (B, H, W), 0, C, dtype=jnp.int32)

        loss, p, oh = batch_weight_dice_loss(scores, target)
        jax.block_until_ready((loss, p, oh))

        ref_loss, ref_p, ref_oh = _reference(scores, target)
        assert jnp.allclose(loss, ref_loss, atol=1e-5, rtol=1e-5), (loss, ref_loss)
        assert jnp.allclose(p, ref_p, atol=1e-5, rtol=1e-5)
        assert jnp.allclose(oh, ref_oh)

    print("KERNEL_OK")
</pallas_src>

<mosaic_0001>
module attributes {stable_mosaic.version = 11 : i64} {
  func.func @_dice_kernel(%arg0: i32, %arg1: i32, %arg2: memref<1x1x256xi32, #tpu.memory_space<vmem>>, %arg3: memref<1x4x256xf32, #tpu.memory_space<vmem>>, %arg4: memref<1x4x256xf32, #tpu.memory_space<vmem>>, %arg5: memref<1x4x256xf32, #tpu.memory_space<vmem>>, %arg6: memref<1x4x1xf32, #tpu.memory_space<vmem>>, %arg7: memref<1x4x1xf32, #tpu.memory_space<vmem>>, %arg8: memref<1x4x1xf32, #tpu.memory_space<vmem>>) attributes {dimension_semantics = [#tpu.dimension_semantics<parallel>, #tpu.dimension_semantics<arbitrary>], iteration_bounds = array<i64: 2, 1>, scalar_prefetch = 0 : i64, scratch_operands = 0 : i64, tpu.core_type = #tpu.core_type<tc>, window_params = [{transform_indices = @transform_0, window_bounds = array<i64: 1, 1, 256>}, {transform_indices = @transform_1, window_bounds = array<i64: 1, 4, 256>}, {transform_indices = @transform_2, window_bounds = array<i64: 1, 4, 256>}, {transform_indices = @transform_3, window_bounds = array<i64: 1, 4, 256>}, {transform_indices = @transform_4, window_bounds = array<i64: 1, 4, 1>}, {transform_indices = @transform_5, window_bounds = array<i64: 1, 4, 1>}, {transform_indices = @transform_6, window_bounds = array<i64: 1, 4, 1>}]} {
    %c0 = arith.constant 0 : index
    %c0_0 = arith.constant 0 : index
    %c0_1 = arith.constant 0 : index
    %0 = vector.load %arg3[%c0, %c0_0, %c0_1] : memref<1x4x256xf32, #tpu.memory_space<vmem>>, vector<1x4x256xf32>
    %1 = vector.shape_cast %0 : vector<1x4x256xf32> to vector<4x256xf32>
    %cst = arith.constant dense<0xFF800000> : vector<256xf32>
    %2 = vector.multi_reduction <maximumf>, %1, %cst [0] : vector<4x256xf32> to vector<256xf32>
    %3 = vector.shape_cast %2 : vector<256xf32> to vector<1x256xf32>
    %4 = vector.broadcast %3 : vector<1x256xf32> to vector<4x256xf32>
    %5 = arith.subf %1, %4 : vector<4x256xf32>
    %6 = math.exp %5 : vector<4x256xf32>
    %cst_2 = arith.constant dense<0.000000e+00> : vector<256xf32>
    %7 = vector.multi_reduction <add>, %6, %cst_2 [0] : vector<4x256xf32> to vector<256xf32>
    %8 = vector.shape_cast %7 : vector<256xf32> to vector<1x256xf32>
    %9 = tpu.reciprocal %8 : vector<1x256xf32> -> vector<1x256xf32>
    %10 = vector.broadcast %9 : vector<1x256xf32> to vector<4x256xf32>
    %11 = arith.mulf %6, %10 : vector<4x256xf32>
    %c0_3 = arith.constant 0 : index
    %c0_4 = arith.constant 0 : index
    %c0_5 = arith.constant 0 : index
    %12 = vector.load %arg2[%c0_3, %c0_4, %c0_5] : memref<1x1x256xi32, #tpu.memory_space<vmem>>, vector<1x1x256xi32>
    %13 = vector.shape_cast %12 : vector<1x1x256xi32> to vector<1x256xi32>
    %14 = tpu.iota {dimensions = array<i32: 0>} : vector<4x256xi32>
    %15 = vector.broadcast %13 : vector<1x256xi32> to vector<4x256xi32>
    %16 = arith.cmpi eq, %14, %15 : vector<4x256xi32>
    %17 = arith.extui %16 : vector<4x256xi1> to vector<4x256xi32>
    %18 = arith.sitofp %17 : vector<4x256xi32> to vector<4x256xf32>
    %c0_6 = arith.constant 0 : index
    %c0_7 = arith.constant 0 : index
    %c0_8 = arith.constant 0 : index
    %19 = vector.load %arg4[%c0_6, %c0_7, %c0_8] : memref<1x4x256xf32, #tpu.memory_space<vmem>>, vector<1x4x256xf32>
    %20 = vector.shape_cast %19 : vector<1x4x256xf32> to vector<4x256xf32>
    %21 = vector.shape_cast %11 : vector<4x256xf32> to vector<1x4x256xf32>
    tpu.vector_store %arg4[%c0_6, %c0_7, %c0_8], %21 {strides = array<i32>} : memref<1x4x256xf32, #tpu.memory_space<vmem>>, vector<1x4x256xf32>,
    %c0_9 = arith.constant 0 : index
    %c0_10 = arith.constant 0 : index
    %c0_11 = arith.constant 0 : index
    %22 = vector.load %arg5[%c0_9, %c0_10, %c0_11] : memref<1x4x256xf32, #tpu.memory_space<vmem>>, vector<1x4x256xf32>
    %23 = vector.shape_cast %22 : vector<1x4x256xf32> to vector<4x256xf32>
    %24 = vector.shape_cast %18 : vector<4x256xf32> to vector<1x4x256xf32>
    tpu.vector_store %arg5[%c0_9, %c0_10, %c0_11], %24 {strides = array<i32>} : memref<1x4x256xf32, #tpu.memory_space<vmem>>, vector<1x4x256xf32>,
    %c0_i32 = arith.constant 0 : i32
    %25 = arith.cmpi eq, %arg1, %c0_i32 : i32
    %26 = arith.extui %25 : i1 to i32
    %c0_i32_12 = arith.constant 0 : i32
    %27 = arith.cmpi ne, %26, %c0_i32_12 : i32
    scf.if %27 {
      %cst_34 = arith.constant 0.000000e+00 : f32
      %53 = vector.broadcast %cst_34 : f32 to vector<4x1xf32>
      %c0_35 = arith.constant 0 : index
      %c0_36 = arith.constant 0 : index
      %c0_37 = arith.constant 0 : index
      %54 = vector.load %arg6[%c0_35, %c0_36, %c0_37] : memref<1x4x1xf32, #tpu.memory_space<vmem>>, vector<1x4x1xf32>
      %55 = vector.shape_cast %54 : vector<1x4x1xf32> to vector<4x1xf32>
      %56 = vector.shape_cast %53 : vector<4x1xf32> to vector<1x4x1xf32>
      tpu.vector_store %arg6[%c0_35, %c0_36, %c0_37], %56 {strides = array<i32>} : memref<1x4x1xf32, #tpu.memory_space<vmem>>, vector<1x4x1xf32>,
      %cst_38 = arith.constant 0.000000e+00 : f32
      %57 = vector.broadcast %cst_38 : f32 to vector<4x1xf32>
      %c0_39 = arith.constant 0 : index
      %c0_40 = arith.constant 0 : index
      %c0_41 = arith.constant 0 : index
      %58 = vector.load %arg7[%c0_39, %c0_40, %c0_41] : memref<1x4x1xf32, #tpu.memory_space<vmem>>, vector<1x4x1xf32>
      %59 = vector.shape_cast %58 : vector<1x4x1xf32> to vector<4x1xf32>
      %60 = vector.shape_cast %57 : vector<4x1xf32> to vector<1x4x1xf32>
      tpu.vector_store %arg7[%c0_39, %c0_40, %c0_41], %60 {strides = array<i32>} : memref<1x4x1xf32, #tpu.memory_space<vmem>>, vector<1x4x1xf32>,
      %cst_42 = arith.constant 0.000000e+00 : f32
      %61 = vector.broadcast %cst_42 : f32 to vector<4x1xf32>
      %c0_43 = arith.constant 0 : index
      %c0_44 = arith.constant 0 : index
      %c0_45 = arith.constant 0 : index
      %62 = vector.load %arg8[%c0_43, %c0_44, %c0_45] : memref<1x4x1xf32, #tpu.memory_space<vmem>>, vector<1x4x1xf32>
      %63 = vector.shape_cast %62 : vector<1x4x1xf32> to vector<4x1xf32>
      %64 = vector.shape_cast %61 : vector<4x1xf32> to vector<1x4x1xf32>
      tpu.vector_store %arg8[%c0_43, %c0_44, %c0_45], %64 {strides = array<i32>} : memref<1x4x1xf32, #tpu.memory_space<vmem>>, vector<1x4x1xf32>,
    } else {
    }
    %c0_13 = arith.constant 0 : index
    %c0_14 = arith.constant 0 : index
    %c0_15 = arith.constant 0 : index
    %28 = vector.load %arg6[%c0_13, %c0_14, %c0_15] : memref<1x4x1xf32, #tpu.memory_space<vmem>>, vector<1x4x1xf32>
    %29 = vector.shape_cast %28 : vector<1x4x1xf32> to vector<4x1xf32>
    %30 = arith.mulf %11, %18 : vector<4x256xf32>
    %cst_16 = arith.constant dense<0.000000e+00> : vector<4xf32>
    %31 = vector.multi_reduction <add>, %30, %cst_16 [1] : vector<4x256xf32> to vector<4xf32>
    %32 = vector.shape_cast %31 : vector<4xf32> to vector<4x1xf32>
    %33 = arith.addf %29, %32 : vector<4x1xf32>
    %c0_17 = arith.constant 0 : index
    %c0_18 = arith.constant 0 : index
    %c0_19 = arith.constant 0 : index
    %34 = vector.load %arg6[%c0_17, %c0_18, %c0_19] : memref<1x4x1xf32, #tpu.memory_space<vmem>>, vector<1x4x1xf32>
    %35 = vector.shape_cast %34 : vector<1x4x1xf32> to vector<4x1xf32>
    %36 = vector.shape_cast %33 : vector<4x1xf32> to vector<1x4x1xf32>
    tpu.vector_store %arg6[%c0_17, %c0_18, %c0_19], %36 {strides = array<i32>} : memref<1x4x1xf32, #tpu.memory_space<vmem>>, vector<1x4x1xf32>,
    %c0_20 = arith.constant 0 : index
    %c0_21 = arith.constant 0 : index
    %c0_22 = arith.constant 0 : index
    %37 = vector.load %arg7[%c0_20, %c0_21, %c0_22] : memref<1x4x1xf32, #tpu.memory_space<vmem>>, vector<1x4x1xf32>
    %38 = vector.shape_cast %37 : vector<1x4x1xf32> to vector<4x1xf32>
    %cst_23 = arith.constant dense<0.000000e+00> : vector<4xf32>
    %39 = vector.multi_reduction <add>, %11, %cst_23 [1] : vector<4x256xf32> to vector<4xf32>
    %40 = vector.shape_cast %39 : vector<4xf32> to vector<4x1xf32>
    %41 = arith.addf %38, %40 : vector<4x1xf32>
    %c0_24 = arith.constant 0 : index
    %c0_25 = arith.constant 0 : index
    %c0_26 = arith.constant 0 : index
    %42 = vector.load %arg7[%c0_24, %c0_25, %c0_26] : memref<1x4x1xf32, #tpu.memory_space<vmem>>, vector<1x4x1xf32>
    %43 = vector.shape_cast %42 : vector<1x4x1xf32> to vector<4x1xf32>
    %44 = vector.shape_cast %41 : vector<4x1xf32> to vector<1x4x1xf32>
    tpu.vector_store %arg7[%c0_24, %c0_25, %c0_26], %44 {strides = array<i32>} : memref<1x4x1xf32, #tpu.memory_space<vmem>>, vector<1x4x1xf32>,
    %c0_27 = arith.constant 0 : index
    %c0_28 = arith.constant 0 : index
    %c0_29 = arith.constant 0 : index
    %45 = vector.load %arg8[%c0_27, %c0_28, %c0_29] : memref<1x4x1xf32, #tpu.memory_space<vmem>>, vector<1x4x1xf32>
    %46 = vector.shape_cast %45 : vector<1x4x1xf32> to vector<4x1xf32>
    %cst_30 = arith.constant dense<0.000000e+00> : vector<4xf32>
    %47 = vector.multi_reduction <add>, %18, %cst_30 [1] : vector<4x256xf32> to vector<4xf32>
    %48 = vector.shape_cast %47 : vector<4xf32> to vector<4x1xf32>
    %49 = arith.addf %46, %48 : vector<4x1xf32>
    %c0_31 = arith.constant 0 : index
    %c0_32 = arith.constant 0 : index
    %c0_33 = arith.constant 0 : index
    %50 = vector.load %arg8[%c0_31, %c0_32, %c0_33] : memref<1x4x1xf32, #tpu.memory_space<vmem>>, vector<1x4x1xf32>
    %51 = vector.shape_cast %50 : vector<1x4x1xf32> to vector<4x1xf32>
    %52 = vector.shape_cast %49 : vector<4x1xf32> to vector<1x4x1xf32>
    tpu.vector_store %arg8[%c0_31, %c0_32, %c0_33], %52 {strides = array<i32>} : memref<1x4x1xf32, #tpu.memory_space<vmem>>, vector<1x4x1xf32>,
    return
  }
  func.func @transform_0(%arg0: i32, %arg1: i32) -> (i32, i32, i32) {
    %c0_i32 = arith.constant 0 : i32
    %c0_i32_0 = arith.constant 0 : i32
    return %arg0, %c0_i32, %arg1 : i32, i32, i32
  }
  func.func @transform_1(%arg0: i32, %arg1: i32) -> (i32, i32, i32) {
    %c0_i32 = arith.constant 0 : i32
    %c0_i32_0 = arith.constant 0 : i32
    return %arg0, %c0_i32, %arg1 : i32, i32, i32
  }
  func.func @transform_2(%arg0: i32, %arg1: i32) -> (i32, i32, i32) {
    %c0_i32 = arith.constant 0 : i32
    %c0_i32_0 = arith.constant 0 : i32
    return %arg0, %c0_i32, %arg1 : i32, i32, i32
  }
  func.func @transform_3(%arg0: i32, %arg1: i32) -> (i32, i32, i32) {
    %c0_i32 = arith.constant 0 : i32
    %c0_i32_0 = arith.constant 0 : i32
    return %arg0, %c0_i32, %arg1 : i32, i32, i32
  }
  func.func @transform_4(%arg0: i32, %arg1: i32) -> (i32, i32, i32) {
    %c0_i32 = arith.constant 0 : i32
    %c0_i32_0 = arith.constant 0 : i32
    %c0_i32_1 = arith.constant 0 : i32
    return %arg0, %c0_i32, %c0_i32_0 : i32, i32, i32
  }
  func.func @transform_5(%arg0: i32, %arg1: i32) -> (i32, i32, i32) {
    %c0_i32 = arith.constant 0 : i32
    %c0_i32_0 = arith.constant 0 : i32
    %c0_i32_1 = arith.constant 0 : i32
    return %arg0, %c0_i32, %c0_i32_0 : i32, i32, i32
  }
  func.func @transform_6(%arg0: i32, %arg1: i32) -> (i32, i32, i32) {
    %c0_i32 = arith.constant 0 : i32
    %c0_i32_0 = arith.constant 0 : i32
    %c0_i32_1 = arith.constant 0 : i32
    return %arg0, %c0_i32, %c0_i32_0 : i32, i32, i32
  }
}

</mosaic_0001>

<llo_original>
// kernel: batch_weight_dice_loss.1
$region0: #{batch_weight_dice_loss.1}
  #allocation0 [shape = 'u32[]', space=smem, size = 0x4, offset = 0x4, fixed_abs, tag = 'smem constant byte address 0x4 - core index']
  #allocation1 [shape = 'u32[144,128]{1,0:T(1,128)}', space=vmem, size = 0x12000, scoped, tag = 'internal scratch']
  %s0 = inlined_call_operand.vmem [shape: s32[2,1,256], index: 0, kind: input, shape index: {}]
  %s1 = inlined_call_operand.vmem [shape: f32[2,4,256], index: 1, kind: input, shape index: {}]
  %s2 = inlined_call_operand.vmem [shape: f32[2,4,256], index: 2, kind: output, shape index: {0}]
  %s3 = inlined_call_operand.vmem [shape: f32[2,4,256], index: 3, kind: output, shape index: {1}]
  %s4 = inlined_call_operand.vmem [shape: f32[2,4,1], index: 4, kind: output, shape index: {2}]
  %s5 = inlined_call_operand.vmem [shape: f32[2,4,1], index: 5, kind: output, shape index: {3}]
  %s6 = inlined_call_operand.vmem [shape: f32[2,4,1], index: 6, kind: output, shape index: {4}]
  %7 = xla_tuple %s2, %s3, %s4, %s5, %s6
  %s8 = sld [smem:[#allocation0]]
  $region77: #{batch_weight_dice_loss.1} parent=0
    _
  %s10 = ssub.s32 1, %s8
  %s11 = scalar_select 0, %s10, %s8
  loop: start=0, step=1, limit=4
  $region2: #{batch_weight_dice_loss.1} parent=0 // loop_pre_header
    _
  $region3: #{batch_weight_dice_loss.1} parent=0 // loop_header
    %s13 = sphi 0, %s17
    %p14 = scmp.ge.s32.totalorder %s13, 4
    %s20 = sphi 0, %s32
    %s21 = sphi 0, %s28
    %s22 = sphi 0, %s20
    %s23 = sphi 0, %s21
    %s24 = sphi 0, %s22
    %s25 = sphi 0, %s23
    %s37 = sphi 0, %s39
    %s40 = sphi 0, %s37
    %s41 = sphi 0, %s40
    %s57 = sphi 0, %s41
    %s65 = sphi 0, %s67
    %s68 = sphi 0, %s65
    %s69 = sphi 0, %s68
    %s85 = sphi 0, %s69
    %s93 = sphi 0, %s95
    %s96 = sphi 0, %s93
    %s97 = sphi 0, %s96
    %s113 = sphi 0, %s97
    %s121 = sphi 0, %s123
    %s124 = sphi 0, %s121
    %s125 = sphi 0, %s124
    %s141 = sphi 0, %s125
    %s147 = sphi 0, %s149
    %s150 = sphi 0, %s147
    %s151 = sphi 0, %s150
    %s167 = sphi 0, %s151
    %s173 = sphi 0, %s175
    %s176 = sphi 0, %s173
    %s177 = sphi 0, %s176
    %s193 = sphi 0, %s177
    %s199 = sphi 0, %s201
    %s202 = sphi 0, %s199
    %s203 = sphi 0, %s202
    %s219 = sphi 0, %s203
  $region4: #{batch_weight_dice_loss.1} parent=0 // loop_header_branch
    %16 = sbr.rel (%p14) target = $region8
  $region5: #{batch_weight_dice_loss.1} parent=0 // loop_body
    %s18 = ssub.s32 %s13, 1
    %s19 = ssub.s32 %s13, 2
    %s26 = sadd.s32 1, %s21
    %p27 = scmp.ge.s32.totalorder %s26, 1
    %s28 = scalar_select %p27, 0, %s26
    %s29 = sadd.s32 1, %s20
    %s30 = scalar_select %p27, %s29, %s20
    %p31 = scmp.ge.s32.totalorder %s30, 2
    %s32 = scalar_select %p31, 0, %s30
    %s33 = ssub.s32 %s20, %s32
    %s34 = ssub.s32 %s21, %s28
    %s35 = sor.u32 %s33, %s34
    %p36 = scmp.eq.s32.totalorder %s35, 0
    %s38 = sadd.s32 %s37, 1
    %s39 = scalar_select %p36, %s37, %s38
    %p42 = pneg %p36
    %p43 = scmp.eq.s32.totalorder %s13, 1
    %p44 = por %p42, %p43
    %p45 = scmp.ne.s32.totalorder %s37, %s40
    %p46 = scmp.eq.s32.totalorder %s13, 0
    %p47 = por %p45, %p46
    %p48 = scmp.ne.s32.totalorder %s37, %s40
    %p49 = scmp.eq.s32.totalorder %s18, 1
    %p50 = por %p48, %p49
    %p51 = scmp.ne.s32.totalorder %s40, %s41
    %p52 = scmp.eq.s32.totalorder %s18, 0
    %p53 = por %p51, %p52
    %p54 = scmp.ne.s32.totalorder %s40, %s41
    %p55 = scmp.eq.s32.totalorder %s19, 1
    %p56 = por %p54, %p55
    %p58 = scmp.ne.s32.totalorder %s41, %s57
    %p59 = scmp.eq.s32.totalorder %s19, 0
    %p60 = por %p58, %p59
    %s61 = ssub.s32 %s20, %s32
    %s62 = ssub.s32 %s21, %s28
    %s63 = sor.u32 %s61, %s62
    %p64 = scmp.eq.s32.totalorder %s63, 0
    %s66 = sadd.s32 %s65, 1
    %s67 = scalar_select %p64, %s65, %s66
    %p70 = pneg %p64
    %p71 = scmp.eq.s32.totalorder %s13, 1
    %p72 = por %p70, %p71
    %p73 = scmp.ne.s32.totalorder %s65, %s68
    %p74 = scmp.eq.s32.totalorder %s13, 0
    %p75 = por %p73, %p74
    %p76 = scmp.ne.s32.totalorder %s65, %s68
    %p77 = scmp.eq.s32.totalorder %s18, 1
    %p78 = por %p76, %p77
    %p79 = scmp.ne.s32.totalorder %s68, %s69
    %p80 = scmp.eq.s32.totalorder %s18, 0
    %p81 = por %p79, %p80
    %p82 = scmp.ne.s32.totalorder %s68, %s69
    %p83 = scmp.eq.s32.totalorder %s19, 1
    %p84 = por %p82, %p83
    %p86 = scmp.ne.s32.totalorder %s69, %s85
    %p87 = scmp.eq.s32.totalorder %s19, 0
    %p88 = por %p86, %p87
    %s89 = ssub.s32 %s20, %s32
    %s90 = ssub.s32 %s21, %s28
    %s91 = sor.u32 %s89, %s90
    %p92 = scmp.eq.s32.totalorder %s91, 0
    %s94 = sadd.s32 %s93, 1
    %s95 = scalar_select %p92, %s93, %s94
    %p98 = pneg %p92
    %p99 = scmp.eq.s32.totalorder %s13, 1
    %p100 = por %p98, %p99
    %p101 = scmp.ne.s32.totalorder %s93, %s96
    %p102 = scmp.eq.s32.totalorder %s13, 0
    %p103 = por %p101, %p102
    %p104 = scmp.ne.s32.totalorder %s93, %s96
    %p105 = scmp.eq.s32.totalorder %s18, 1
    %p106 = por %p104, %p105
    %p107 = scmp.ne.s32.totalorder %s96, %s97
    %p108 = scmp.eq.s32.totalorder %s18, 0
    %p109 = por %p107, %p108
    %p110 = scmp.ne.s32.totalorder %s96, %s97
    %p111 = scmp.eq.s32.totalorder %s19, 1
    %p112 = por %p110, %p111
    %p114 = scmp.ne.s32.totalorder %s97, %s113
    %p115 = scmp.eq.s32.totalorder %s19, 0
    %p116 = por %p114, %p115
    %s117 = ssub.s32 %s20, %s32
    %s118 = ssub.s32 %s21, %s28
    %s119 = sor.u32 %s117, %s118
    %p120 = scmp.eq.s32.totalorder %s119, 0
    %s122 = sadd.s32 %s121, 1
    %s123 = scalar_select %p120, %s121, %s122
    %p126 = pneg %p120
    %p127 = scmp.eq.s32.totalorder %s13, 1
    %p128 = por %p126, %p127
    %p129 = scmp.ne.s32.totalorder %s121, %s124
    %p130 = scmp.eq.s32.totalorder %s13, 0
    %p131 = por %p129, %p130
    %p132 = scmp.ne.s32.totalorder %s121, %s124
    %p133 = scmp.eq.s32.totalorder %s18, 1
    %p134 = por %p132, %p133
    %p135 = scmp.ne.s32.totalorder %s124, %s125
    %p136 = scmp.eq.s32.totalorder %s18, 0
    %p137 = por %p135, %p136
    %p138 = scmp.ne.s32.totalorder %s124, %s125
    %p139 = scmp.eq.s32.totalorder %s19, 1
    %p140 = por %p138, %p139
    %p142 = scmp.ne.s32.totalorder %s125, %s141
    %p143 = scmp.eq.s32.totalorder %s19, 0
    %p144 = por %p142, %p143
    %s145 = ssub.s32 %s20, %s32
    %p146 = scmp.eq.s32.totalorder %s145, 0
    %s148 = sadd.s32 %s147, 1
    %s149 = scalar_select %p146, %s147, %s148
    %p152 = pneg %p146
    %p153 = scmp.eq.s32.totalorder %s13, 1
    %p154 = por %p152, %p153
    %p155 = scmp.ne.s32.totalorder %s147, %s150
    %p156 = scmp.eq.s32.totalorder %s13, 0
    %p157 = por %p155, %p156
    %p158 = scmp.ne.s32.totalorder %s147, %s150
    %p159 = scmp.eq.s32.totalorder %s18, 1
    %p160 = por %p158, %p159
    %p161 = scmp.ne.s32.totalorder %s150, %s151
    %p162 = scmp.eq.s32.totalorder %s18, 0
    %p163 = por %p161, %p162
    %p164 = scmp.ne.s32.totalorder %s150, %s151
    %p165 = scmp.eq.s32.totalorder %s19, 1
    %p166 = por %p164, %p165
    %p168 = scmp.ne.s32.totalorder %s151, %s167
    %p169 = scmp.eq.s32.totalorder %s19, 0
    %p170 = por %p168, %p169
    %s171 = ssub.s32 %s20, %s32
    %p172 = scmp.eq.s32.totalorder %s171, 0
    %s174 = sadd.s32 %s173, 1
    %s175 = scalar_select %p172, %s173, %s174
    %p178 = pneg %p172
    %p179 = scmp.eq.s32.totalorder %s13, 1
    %p180 = por %p178, %p179
    %p181 = scmp.ne.s32.totalorder %s173, %s176
    %p182 = scmp.eq.s32.totalorder %s13, 0
    %p183 = por %p181, %p182
    %p184 = scmp.ne.s32.totalorder %s173, %s176
    %p185 = scmp.eq.s32.totalorder %s18, 1
    %p186 = por %p184, %p185
    %p187 = scmp.ne.s32.totalorder %s176, %s177
    %p188 = scmp.eq.s32.totalorder %s18, 0
    %p189 = por %p187, %p188
    %p190 = scmp.ne.s32.totalorder %s176, %s177
    %p191 = scmp.eq.s32.totalorder %s19, 1
    %p192 = por %p190, %p191
    %p194 = scmp.ne.s32.totalorder %s177, %s193
    %p195 = scmp.eq.s32.totalorder %s19, 0
    %p196 = por %p194, %p195
    %s197 = ssub.s32 %s20, %s32
    %p198 = scmp.eq.s32.totalorder %s197, 0
    %s200 = sadd.s32 %s199, 1
    %s201 = scalar_select %p198, %s199, %s200
    %p204 = pneg %p198
    %p205 = scmp.eq.s32.totalorder %s13, 1
    %p206 = por %p204, %p205
    %p207 = scmp.ne.s32.totalorder %s199, %s202
    %p208 = scmp.eq.s32.totalorder %s13, 0
    %p209 = por %p207, %p208
    %p210 = scmp.ne.s32.totalorder %s199, %s202
    %p211 = scmp.eq.s32.totalorder %s18, 1
    %p212 = por %p210, %p211
    %p213 = scmp.ne.s32.totalorder %s202, %s203
    %p214 = scmp.eq.s32.totalorder %s18, 0
    %p215 = por %p213, %p214
    %p216 = scmp.ne.s32.totalorder %s202, %s203
    %p217 = scmp.eq.s32.totalorder %s19, 1
    %p218 = por %p216, %p217
    %p220 = scmp.ne.s32.totalorder %s203, %s219
    %p221 = scmp.eq.s32.totalorder %s19, 0
    %p222 = por %p220, %p221
    %p223 = scmp.le.s32.totalorder 1, %s13
    %p224 = scmp.lt.s32.totalorder %s13, 3
    %p225 = pnand %p223, %p224
    %p226 = pneg %p225
    // Predicated region
    $region9: #{batch_weight_dice_loss.1} parent=5 // pred_check
      _
    $region10: #{batch_weight_dice_loss.1} parent=5 // pred_check_branch
      %228 = sbr.rel (%p225) target = $region12
    $region11: #{batch_weight_dice_loss.1} parent=5 // pred_region
      %s229 = ssub.s32 %s13, 1
    $region12: #{batch_weight_dice_loss.1} parent=5 // pred_fallthru
      _
    %p230 = scmp.lt.s32.totalorder %s13, 2
    // Predicated region
    $region13: #{batch_weight_dice_loss.1} parent=5 // pred_check
      %p231 = pneg %p230
    $region14: #{batch_weight_dice_loss.1} parent=5 // pred_check_branch
      %233 = sbr.rel (%p231) target = $region16
    $region15: #{batch_weight_dice_loss.1} parent=5 // pred_region
      // Predicated region
      $region17: #{batch_weight_dice_loss.1} parent=15 // pred_check
        %p234 = pneg %p47
      $region18: #{batch_weight_dice_loss.1} parent=15 // pred_check_branch
        %236 = sbr.rel (%p234) target = $region20
      $region19: #{batch_weight_dice_loss.1} parent=15 // pred_region
        %s237 = smul.u32 2, %s21
        %p238 = scmp.lt.s32.totalorder %s20, 1
        %s239 = scalar_select %p238, %s20, 1
        %p240 = scmp.lt.s32.totalorder %s237, 1
        %s241 = scalar_select %p240, %s237, 1
        %s242 = smul.addr %s239, 2
        %s243 = sadd.s32 %s241, %s242
        %s244 = scalar_lea.vmem %s0, %s243
        %s245 = smul.u32 2, %s21
      $region20: #{batch_weight_dice_loss.1} parent=15 // pred_fallthru
        _
      // Predicated region
      $region21: #{batch_weight_dice_loss.1} parent=15 // pred_check
        %p246 = pneg %p75
      $region22: #{batch_weight_dice_loss.1} parent=15 // pred_check_branch
        %248 = sbr.rel (%p246) target = $region24
      $region23: #{batch_weight_dice_loss.1} parent=15 // pred_region
        %s249 = smul.u32 2, %s21
        %p250 = scmp.lt.s32.totalorder %s20, 1
        %s251 = scalar_select %p250, %s20, 1
        %p252 = scmp.lt.s32.totalorder %s249, 1
        %s253 = scalar_select %p252, %s249, 1
        %s254 = smul.addr %s251, 2
        %s255 = sadd.s32 %s253, %s254
        %s256 = smul.addr %s255, 4
        %s257 = scalar_lea.vmem %s1, %s256
        %s258 = smul.u32 2, %s21
      $region24: #{batch_weight_dice_loss.1} parent=15 // pred_fallthru
        _
    $region16: #{batch_weight_dice_loss.1} parent=5 // pred_fallthru
      _
    %p259 = scmp.le.s32.totalorder 1, %s13
    %p260 = scmp.lt.s32.totalorder %s13, 3
    %p261 = pnand %p259, %p260
    %p262 = pneg %p261
    // Predicated region
    $region25: #{batch_weight_dice_loss.1} parent=5 // pred_check
      _
    $region26: #{batch_weight_dice_loss.1} parent=5 // pred_check_branch
      %264 = sbr.rel (%p261) target = $region28
    $region27: #{batch_weight_dice_loss.1} parent=5 // pred_region
      %s265 = ssub.s32 %s13, 1
      %s266 = smul.u32 2, %s23
      %p267 = scmp.lt.s32.totalorder %s22, 1
      %s268 = scalar_select %p267, %s22, 1
      %p269 = scmp.lt.s32.totalorder %s266, 1
      %s270 = scalar_select %p269, %s266, 1
      %s271 = smul.addr %s268, 2
      %s272 = sadd.s32 %s270, %s271
      %s273 = scalar_lea.vmem %s0, %s272
      %p274 = pneg %p53
      %p275 = pneg %p50
      %s276 = smul.u32 2, %s23
      %p277 = scmp.lt.s32.totalorder %s22, 1
      %s278 = scalar_select %p277, %s22, 1
      %p279 = scmp.lt.s32.totalorder %s276, 1
      %s280 = scalar_select %p279, %s276, 1
      %s281 = smul.addr %s278, 2
      %s282 = sadd.s32 %s280, %s281
      %s283 = smul.addr %s282, 4
      %s284 = scalar_lea.vmem %s1, %s283
      %p285 = pneg %p81
      %p286 = pneg %p78
      %p287 = pneg %p109
      %p288 = pneg %p106
      %s289 = smul.u32 2, %s23
      %p290 = scmp.lt.s32.totalorder %s22, 1
      %s291 = scalar_select %p290, %s22, 1
      %p292 = scmp.lt.s32.totalorder %s289, 1
      %s293 = scalar_select %p292, %s289, 1
      %s294 = smul.addr %s291, 2
      %s295 = sadd.s32 %s293, %s294
      %s296 = smul.addr %s295, 4
      %s297 = scalar_lea.vmem %s2, %s296
      %p298 = pneg %p137
      %p299 = pneg %p134
      %s300 = smul.u32 2, %s23
      %p301 = scmp.lt.s32.totalorder %s22, 1
      %s302 = scalar_select %p301, %s22, 1
      %p303 = scmp.lt.s32.totalorder %s300, 1
      %s304 = scalar_select %p303, %s300, 1
      %s305 = smul.addr %s302, 2
      %s306 = sadd.s32 %s304, %s305
      %s307 = smul.addr %s306, 4
      %s308 = scalar_lea.vmem %s3, %s307
      %p309 = pneg %p163
      %p310 = pneg %p160
      %p311 = scmp.lt.s32.totalorder %s22, 1
      %s312 = scalar_select %p311, %s22, 1
      %s313 = smul.addr %s312, 4
      %s314 = scalar_lea.vmem %s4, %s313
      %p315 = pneg %p189
      %p316 = pneg %p186
      %p317 = scmp.lt.s32.totalorder %s22, 1
      %s318 = scalar_select %p317, %s22, 1
      %s319 = smul.addr %s318, 4
      %s320 = scalar_lea.vmem %s5, %s319
      %p321 = pneg %p215
      %p322 = pneg %p212
      %p323 = scmp.lt.s32.totalorder %s22, 1
      %s324 = scalar_select %p323, %s22, 1
      %s325 = smul.addr %s324, 4
      %s326 = scalar_lea.vmem %s6, %s325
      %s327 = smul.u32 2, %s23
      %p328 = scmp.lt.s32.totalorder %s22, 1
      %s329 = scalar_select %p328, %s22, 1
      %p330 = scmp.lt.s32.totalorder %s327, 1
      %s331 = scalar_select %p330, %s327, 1
      %s332 = smul.addr %s329, 2
      %s333 = sadd.s32 %s331, %s332
      %s334 = scalar_lea.vmem %s0, %s333
      %s335 = smul.u32 2, %s23
      %s336 = smul.u32 2, %s23
      %p337 = scmp.lt.s32.totalorder %s22, 1
      %s338 = scalar_select %p337, %s22, 1
      %p339 = scmp.lt.s32.totalorder %s336, 1
      %s340 = scalar_select %p339, %s336, 1
      %s341 = smul.addr %s338, 2
      %s342 = sadd.s32 %s340, %s341
      %s343 = smul.addr %s342, 4
      %s344 = scalar_lea.vmem %s1, %s343
      %s345 = smul.u32 2, %s23
      %s346 = smul.u32 2, %s23
      %p347 = scmp.lt.s32.totalorder %s22, 1
      %s348 = scalar_select %p347, %s22, 1
      %p349 = scmp.lt.s32.totalorder %s346, 1
      %s350 = scalar_select %p349, %s346, 1
      %s351 = smul.addr %s348, 2
      %s352 = sadd.s32 %s350, %s351
      %s353 = smul.addr %s352, 4
      %s354 = scalar_lea.vmem %s2, %s353
      %s355 = smul.u32 2, %s23
      %s356 = smul.u32 2, %s23
      %p357 = scmp.lt.s32.totalorder %s22, 1
      %s358 = scalar_select %p357, %s22, 1
      %p359 = scmp.lt.s32.totalorder %s356, 1
      %s360 = scalar_select %p359, %s356, 1
      %s361 = smul.addr %s358, 2
      %s362 = sadd.s32 %s360, %s361
      %s363 = smul.addr %s362, 4
      %s364 = scalar_lea.vmem %s3, %s363
      %s365 = smul.u32 2, %s23
      %p366 = scmp.lt.s32.totalorder %s22, 1
      %s367 = scalar_select %p366, %s22, 1
      %s368 = smul.addr %s367, 4
      %s369 = scalar_lea.vmem %s4, %s368
      %p370 = scmp.lt.s32.totalorder %s22, 1
      %s371 = scalar_select %p370, %s22, 1
      %s372 = smul.addr %s371, 4
      %s373 = scalar_lea.vmem %s5, %s372
      %p374 = scmp.lt.s32.totalorder %s22, 1
      %s375 = scalar_select %p374, %s22, 1
      %s376 = smul.addr %s375, 4
      %s377 = scalar_lea.vmem %s6, %s376
      %v378 = vld [vmem:[%s344] sm:$0xff]
      %v380 = vcombine.high %v378, %v378
      %vm382 = vcmask 1043456
      %v383 = vsel %vm382, %v378, -inf
      %v384 = vrot.slane %v383, 4
      %v385 = vmax.f32 %v383, %v384
      %v386 = vrot.slane %v385, 2
      %v387 = vmax.f32 %v385, %v386
      %v388 = vrot.slane %v387, 1
      %v389 = vmax.f32 %v387, %v388
      %v390 = vsel %vm382, %v380, -inf
      %v391 = vrot.slane %v390, 4
      %v392 = vmax.f32 %v390, %v391
      %v393 = vrot.slane %v392, 2
      %v394 = vmax.f32 %v392, %v393
      %v395 = vrot.slane %v394, 1
      %v396 = vmax.f32 %v394, %v395
      %v399 = vcombine.low %v389, %v396
      %v401 = vsub.f32 %v378, %v399
      %v402 = vmul.f32 %v401, 1.442695
      %v403 = vpow.pop %v402
      %v405 = vcombine.high %v403, %v403
      %v407 = vsel %vm382, %v403, 0.0
      %v408 = vrot.slane %v407, 4
      %v409 = vadd.f32 %v407, %v408
      %v410 = vrot.slane %v409, 2
      %v411 = vadd.f32 %v409, %v410
      %v412 = vrot.slane %v411, 1
      %v413 = vadd.f32 %v411, %v412
      %v414 = vsel %vm382, %v405, 0.0
      %v415 = vrot.slane %v414, 4
      %v416 = vadd.f32 %v414, %v415
      %v417 = vrot.slane %v416, 2
      %v418 = vadd.f32 %v416, %v417
      %v419 = vrot.slane %v418, 1
      %v420 = vadd.f32 %v418, %v419
      %v421 = vrcp.pop %v413
      %v422 = vrcp.pop %v420
      %v425 = vcombine.low %v421, %v422
      %v427 = vmul.f32 %v403, %v425
      %v428 = vld [vmem:[%s334] sm:$0x3]
      %v429 = vlaneseq
      %v430 = vshrl.u32 %v429, 7
      %v431 = vlaneseq
      %v432 = vshrl.u32 %v431, 7
      %v433 = vsub.s32 0, %v432
      %v434 = vrot.slane %v428, %v433
      %v435 = vlaneseq
      %v436 = vshrl.u32 %v435, 7
      %v437 = vsub.s32 1, %v436
      %v438 = vrot.slane %v428, %v437
      %vm439 = vcmp.eq.s32.totalorder %v430, %v434
      %vm440 = vcmp.eq.s32.totalorder %v430, %v438
      %v441 = vsel %vm439, 1, 0
      %v442 = vsel %vm440, 1, 0
      %v443 = vcvt.s32.f32 %v441
      %v444 = vcvt.s32.f32 %v442
      %445 = vst [vmem:[%s354] sm:$0xff] %v427
      %v448 = vcombine.low %v443, %v444
      %450 = vst [vmem:[%s364] sm:$0xff] %v448
      %p451 = scmp.eq.s32.totalorder %s23, 0
      // Predicated region
      $region29: #{batch_weight_dice_loss.1} parent=27 // pred_check
        %p452 = pneg %p451
      $region30: #{batch_weight_dice_loss.1} parent=27 // pred_check_branch
        %454 = sbr.rel (%p452) target = $region32
      $region31: #{batch_weight_dice_loss.1} parent=27 // pred_region
        %vm455 = vcmask 3072
        %456 = vst.msk [vmem:[%s369] sm:$0xf] %vm455, 0.0
        %457 = vst.msk [vmem:[%s373] sm:$0xf] %vm455, 0.0
        %458 = vst.msk [vmem:[%s377] sm:$0xf] %vm455, 0.0
      $region32: #{batch_weight_dice_loss.1} parent=27 // pred_fallthru
        _
      %v459 = vld [vmem:[%s369] sm:$0xf]
      %v460 = vmul.f32 %v427, %v448
      %v462 = vcombine.high %v460, %v460
      %v464 = vsel %vm382, %v460, 0.0
      %v465 = vsel %vm382, %v462, 0.0
      %v466 = vadd.f32 %v464, %v465
      %467 = vadd.xlane.f32.xlu0 %v466
      %v468 = vpop.xlane.xlu0 %467
      %v469 = vadd.f32 %v459, %v468
      %vm470 = vcmask 3072
      %471 = vst.msk [vmem:[%s369] sm:$0xf] %vm470, %v469
      %v472 = vld [vmem:[%s373] sm:$0xf]
      %v474 = vcombine.high %v427, %v427
      %v476 = vsel %vm382, %v427, 0.0
      %v477 = vsel %vm382, %v474, 0.0
      %v478 = vadd.f32 %v476, %v477
      %479 = vadd.xlane.f32.xlu0 %v478
      %v480 = vpop.xlane.xlu0 %479
      %v481 = vadd.f32 %v472, %v480
      %482 = vst.msk [vmem:[%s373] sm:$0xf] %vm470, %v481
      %v483 = vld [vmem:[%s377] sm:$0xf]
      %v484 = vsel %vm382, %v443, 0.0
      %v485 = vsel %vm382, %v444, 0.0
      %v486 = vadd.f32 %v484, %v485
      %487 = vadd.xlane.f32.xlu0 %v486
      %v488 = vpop.xlane.xlu0 %487
      %v489 = vadd.f32 %v483, %v488
      %490 = vst.msk [vmem:[%s377] sm:$0xf] %vm470, %v489
      %s491 = smul.u32 2, %s23
      %p492 = scmp.lt.s32.totalorder %s22, 1
      %s493 = scalar_select %p492, %s22, 1
      %p494 = scmp.lt.s32.totalorder %s491, 1
      %s495 = scalar_select %p494, %s491, 1
      %s496 = smul.addr %s493, 2
      %s497 = sadd.s32 %s495, %s496
      %s498 = smul.addr %s497, 4
      %s499 = scalar_lea.vmem %s2, %s498
      %s500 = smul.u32 2, %s23
      %p501 = scmp.lt.s32.totalorder %s22, 1
      %s502 = scalar_select %p501, %s22, 1
      %p503 = scmp.lt.s32.totalorder %s500, 1
      %s504 = scalar_select %p503, %s500, 1
      %s505 = smul.addr %s502, 2
      %s506 = sadd.s32 %s504, %s505
      %s507 = smul.addr %s506, 4
      %s508 = scalar_lea.vmem %s3, %s507
      %p509 = scmp.lt.s32.totalorder %s22, 1
      %s510 = scalar_select %p509, %s22, 1
      %s511 = smul.addr %s510, 4
      %s512 = scalar_lea.vmem %s4, %s511
      %p513 = scmp.lt.s32.totalorder %s22, 1
      %s514 = scalar_select %p513, %s22, 1
      %s515 = smul.addr %s514, 4
      %s516 = scalar_lea.vmem %s5, %s515
      %p517 = scmp.lt.s32.totalorder %s22, 1
      %s518 = scalar_select %p517, %s22, 1
      %s519 = smul.addr %s518, 4
      %s520 = scalar_lea.vmem %s6, %s519
      // Predicated region
      $region33: #{batch_weight_dice_loss.1} parent=27 // pred_check
        %p521 = pneg %p106
      $region34: #{batch_weight_dice_loss.1} parent=27 // pred_check_branch
        %523 = sbr.rel (%p521) target = $region36
      $region35: #{batch_weight_dice_loss.1} parent=27 // pred_region
        %s524 = smul.u32 2, %s23
      $region36: #{batch_weight_dice_loss.1} parent=27 // pred_fallthru
        _
      // Predicated region
      $region37: #{batch_weight_dice_loss.1} parent=27 // pred_check
        %p525 = pneg %p134
      $region38: #{batch_weight_dice_loss.1} parent=27 // pred_check_branch
        %527 = sbr.rel (%p525) target = $region40
      $region39: #{batch_weight_dice_loss.1} parent=27 // pred_region
        %s528 = smul.u32 2, %s23
      $region40: #{batch_weight_dice_loss.1} parent=27 // pred_fallthru
        _
      // Predicated region
      $region41: #{batch_weight_dice_loss.1} parent=27 // pred_check
        %p529 = pneg %p160
      $region42: #{batch_weight_dice_loss.1} parent=27 // pred_check_branch
        %531 = sbr.rel (%p529) target = $region44
      $region43: #{batch_weight_dice_loss.1} parent=27 // pred_region
        _
      $region44: #{batch_weight_dice_loss.1} parent=27 // pred_fallthru
        _
      // Predicated region
      $region45: #{batch_weight_dice_loss.1} parent=27 // pred_check
        %p532 = pneg %p186
      $region46: #{batch_weight_dice_loss.1} parent=27 // pred_check_branch
        %534 = sbr.rel (%p532) target = $region48
      $region47: #{batch_weight_dice_loss.1} parent=27 // pred_region
        _
      $region48: #{batch_weight_dice_loss.1} parent=27 // pred_fallthru
        _
      // Predicated region
      $region49: #{batch_weight_dice_loss.1} parent=27 // pred_check
        %p535 = pneg %p212
      $region50: #{batch_weight_dice_loss.1} parent=27 // pred_check_branch
        %537 = sbr.rel (%p535) target = $region52
      $region51: #{batch_weight_dice_loss.1} parent=27 // pred_region
        _
      $region52: #{batch_weight_dice_loss.1} parent=27 // pred_fallthru
        _
    $region28: #{batch_weight_dice_loss.1} parent=5 // pred_fallthru
      _
    %p538 = scmp.le.s32.totalorder 2, %s13
    // Predicated region
    $region53: #{batch_weight_dice_loss.1} parent=5 // pred_check
      %p539 = pneg %p538
    $region54: #{batch_weight_dice_loss.1} parent=5 // pred_check_branch
      %541 = sbr.rel (%p539) target = $region56
    $region55: #{batch_weight_dice_loss.1} parent=5 // pred_region
      %s542 = ssub.s32 %s13, 2
      // Predicated region
      $region57: #{batch_weight_dice_loss.1} parent=55 // pred_check
        %p543 = pneg %p112
      $region58: #{batch_weight_dice_loss.1} parent=55 // pred_check_branch
        %545 = sbr.rel (%p543) target = $region60
      $region59: #{batch_weight_dice_loss.1} parent=55 // pred_region
        %s546 = smul.u32 2, %s25
        %p547 = scmp.lt.s32.totalorder %s24, 1
        %s548 = scalar_select %p547, %s24, 1
        %p549 = scmp.lt.s32.totalorder %s546, 1
        %s550 = scalar_select %p549, %s546, 1
        %s551 = smul.addr %s548, 2
        %s552 = sadd.s32 %s550, %s551
        %s553 = smul.addr %s552, 4
        %s554 = scalar_lea.vmem %s2, %s553
      $region60: #{batch_weight_dice_loss.1} parent=55 // pred_fallthru
        _
      // Predicated region
      $region61: #{batch_weight_dice_loss.1} parent=55 // pred_check
        %p555 = pneg %p140
      $region62: #{batch_weight_dice_loss.1} parent=55 // pred_check_branch
        %557 = sbr.rel (%p555) target = $region64
      $region63: #{batch_weight_dice_loss.1} parent=55 // pred_region
        %s558 = smul.u32 2, %s25
        %p559 = scmp.lt.s32.totalorder %s24, 1
        %s560 = scalar_select %p559, %s24, 1
        %p561 = scmp.lt.s32.totalorder %s558, 1
        %s562 = scalar_select %p561, %s558, 1
        %s563 = smul.addr %s560, 2
        %s564 = sadd.s32 %s562, %s563
        %s565 = smul.addr %s564, 4
        %s566 = scalar_lea.vmem %s3, %s565
      $region64: #{batch_weight_dice_loss.1} parent=55 // pred_fallthru
        _
      // Predicated region
      $region65: #{batch_weight_dice_loss.1} parent=55 // pred_check
        %p567 = pneg %p166
      $region66: #{batch_weight_dice_loss.1} parent=55 // pred_check_branch
        %569 = sbr.rel (%p567) target = $region68
      $region67: #{batch_weight_dice_loss.1} parent=55 // pred_region
        %p570 = scmp.lt.s32.totalorder %s24, 1
        %s571 = scalar_select %p570, %s24, 1
        %s572 = smul.addr %s571, 4
        %s573 = scalar_lea.vmem %s4, %s572
      $region68: #{batch_weight_dice_loss.1} parent=55 // pred_fallthru
        _
      // Predicated region
      $region69: #{batch_weight_dice_loss.1} parent=55 // pred_check
        %p574 = pneg %p192
      $region70: #{batch_weight_dice_loss.1} parent=55 // pred_check_branch
        %576 = sbr.rel (%p574) target = $region72
      $region71: #{batch_weight_dice_loss.1} parent=55 // pred_region
        %p577 = scmp.lt.s32.totalorder %s24, 1
        %s578 = scalar_select %p577, %s24, 1
        %s579 = smul.addr %s578, 4
        %s580 = scalar_lea.vmem %s5, %s579
      $region72: #{batch_weight_dice_loss.1} parent=55 // pred_fallthru
        _
      // Predicated region
      $region73: #{batch_weight_dice_loss.1} parent=55 // pred_check
        %p581 = pneg %p218
      $region74: #{batch_weight_dice_loss.1} parent=55 // pred_check_branch
        %583 = sbr.rel (%p581) target = $region76
      $region75: #{batch_weight_dice_loss.1} parent=55 // pred_region
        %p584 = scmp.lt.s32.totalorder %s24, 1
        %s585 = scalar_select %p584, %s24, 1
        %s586 = smul.addr %s585, 4
        %s587 = scalar_lea.vmem %s6, %s586
      $region76: #{batch_weight_dice_loss.1} parent=55 // pred_fallthru
        _
    $region56: #{batch_weight_dice_loss.1} parent=5 // pred_fallthru
      _
  $region6: #{batch_weight_dice_loss.1} parent=0 // loop_footer
    %s17 = sadd.s32 1, %s13
  $region7: #{batch_weight_dice_loss.1} parent=0 // loop_footer_branch
    %12 = sbr.rel target = $region3
  $region8: #{batch_weight_dice_loss.1} parent=0 // loop_exit
    _

</llo_original>
